<compile_context>
chip_gen: v7x
topology: tpu7x:2x2x1
jax: 0.10.0
libtpu: 0.0.40
codegen_flags: <defaults>
</compile_context>

<pallas_src>
import functools

import jax
import jax.numpy as jnp
from jax import lax
from jax.experimental import pallas as pl
from jax.experimental.pallas import tpu as pltpu

_LANE_CHUNK = 2048  # lanes processed per inner-loop step (vreg-pressure bound)


def _round_up(x, m):
    return (x + m - 1) // m * m


def _raysampler_kernel(od_ref, z_ref, sp_ref, *, lane_chunk):
    # od_ref : (6, TN)        rows 0:3 = origins, rows 3:6 = directions (rays on lanes)
    # z_ref  : (P_pad, 1)     exact linspace depths (rows >= P are padding)
    # sp_ref : (3*P_pad, TN)  row (c*P_pad + p) = o[c] + d[c] * z[p]
    p_pad = z_ref.shape[0]
    tn = sp_ref.shape[1]
    n_chunks = tn // lane_chunk          # exact by construction in the wrapper
    z = z_ref[...]                       # (P_pad, 1)

    def body(j, carry):
        start = pl.multiple_of(j * lane_chunk, 128)
        sl = pl.ds(start, lane_chunk)
        for c in range(3):               # static, fully unrolled (3 components)
            oc = od_ref[pl.ds(c, 1), sl]        # (1, chunk)
            dc = od_ref[pl.ds(3 + c, 1), sl]    # (1, chunk)
            # (1, chunk) (+) (P_pad, 1) -> (P_pad, chunk); row offset c*P_pad is a
            # multiple of 8, so every store is a full, unmasked sublane group.
            sp_ref[pl.ds(c * p_pad, p_pad), sl] = oc + dc * z
        return carry

    if n_chunks == 1:                    # trace-time branch: skip loop overhead
        body(0, 0)
    else:
        lax.fori_loop(0, n_chunks, body, 0)


def _derive_tiling(n, out_rows, p_pad, ray_tile):
    """Pick (ray tile, in-kernel lane chunk, scoped VMEM limit) for this chip."""
    try:
        vmem_cap = int(pltpu.get_tpu_info().vmem_capacity_bytes)
    except Exception:                    # pragma: no cover - conservative fallback
        vmem_cap = 64 * 1024 * 1024      # assume the smallest generation (v7x)

    # Double-buffered working-set budget: half of physical VMEM, capped.
    budget = min(vmem_cap // 2, 48 * 1024 * 1024)
    # Per-lane f32 bytes: 2 buffers x (output rows + 6-row input padded to 8).
    bytes_per_lane = 2 * 4 * (out_rows + 8)
    tile_cap = max(128, (budget // bytes_per_lane) // 128 * 128)

    n128 = _round_up(max(int(n), 1), 128)
    if ray_tile is None:
        # Target ~2 MiB of output per grid step so the ~0.35 us fixed per-step
        # overhead stays a small fraction of the step's HBM time.
        target = _round_up(max((2 * 1024 * 1024) // (4 * out_rows), 128), 128)
    else:
        target = _round_up(int(ray_tile), 128)

    tile = min(target, tile_cap, n128)
    # Keep >= 2 grid steps whenever N allows: uses both v7x TensorCores via
    # dimension_semantics=("parallel",) and overlaps consecutive-step DMAs.
    if n128 >= 2 * 128:
        tile = min(tile, _round_up(pl.cdiv(n128, 2), 128))
    # Make the in-kernel lane chunk divide the tile exactly.
    if tile > _LANE_CHUNK:
        tile = (tile // _LANE_CHUNK) * _LANE_CHUNK
        lane_chunk = _LANE_CHUNK
    else:
        lane_chunk = tile
    tile = max(tile, 128)

    z_buf = 2 * 4 * 128 * p_pad                          # (P_pad, 1) pads lanes to 128
    need = tile * bytes_per_lane + z_buf
    vmem_limit = int(min(vmem_cap * 3 // 4, max(2 * need, 16 * 1024 * 1024)))
    return tile, lane_chunk, vmem_limit


def stratified_raysampler(origins, directions, *, n_pts_per_ray, min_depth,
                          max_depth, ray_tile=None, pytorch_layout=True,
                          materialize_lengths=False):
    """origins, directions: (N, 3) float32.

    pytorch_layout=True  -> sample_points (N, P, 3) (one XLA transpose of the
                            kernel's lane-dense output).
    pytorch_layout=False -> sample_points (3, P, N): lane-dense fast path.
    sample_lengths: (P, 3) z_vals by default (broadcasts identically against
    sample_points); materialize_lengths=True returns the exact PyTorch
    (N, P, 3) tensor (one extra N*P*3*4-byte HBM write).
    """
    N = origins.shape[0]
    assert origins.shape == (N, 3) and directions.shape == (N, 3)
    P = int(n_pts_per_ray)
    p_pad = _round_up(max(P, 1), 8)
    out_rows = 3 * p_pad

    # Exact-endpoint depths (matches torch.linspace, incl. the P == 1 case).
    z = jnp.linspace(float(min_depth), float(max_depth), P, dtype=jnp.float32)  # (P,)
    z_col = jnp.pad(z, (0, p_pad - P))[:, None]                                 # (P_pad, 1)

    tile, lane_chunk, vmem_limit = _derive_tiling(N, out_rows, p_pad, ray_tile)
    n_pad = _round_up(N, tile)
    grid = (n_pad // tile,)

    # Fused component-major input: rows 0:3 origins, 3:6 directions; rays -> lanes.
    od = jnp.concatenate([origins.T, directions.T], axis=0).astype(jnp.float32)  # (6, N)
    if n_pad != N:
        od = jnp.pad(od, ((0, 0), (0, n_pad - N)))

    kernel = functools.partial(_raysampler_kernel, lane_chunk=lane_chunk)

    sp_flat = pl.pallas_call(
        kernel,
        out_shape=jax.ShapeDtypeStruct((out_rows, n_pad), jnp.float32),
        grid_spec=pltpu.PrefetchScalarGridSpec(
            num_scalar_prefetch=0,
            grid=grid,
            in_specs=[pl.BlockSpec((6, tile), lambda i: (0, i)),
                      pl.BlockSpec((p_pad, 1), lambda i: (0, 0))],
            out_specs=pl.BlockSpec((out_rows, tile), lambda i: (0, i)),
        ),
        compiler_params=pltpu.CompilerParams(
            dimension_semantics=("parallel",),
            vmem_limit_bytes=vmem_limit),
    )(od, z_col)

    z_vals = jnp.broadcast_to(z[:, None], (P, 3))                     # (P, 3)
    sp_3pn = sp_flat.reshape(3, p_pad, n_pad)[:, :P, :N]              # (3, P, N)

    if not pytorch_layout:
        return sp_3pn, z_vals

    # One relayout pass (the only remaining extra HBM traffic on this path).
    sample_points = jnp.transpose(sp_3pn, (2, 1, 0))                  # (N, P, 3)
    if materialize_lengths:
        sample_lengths = jnp.broadcast_to(z_vals[None], (N, P, 3))    # exact PyTorch output
    else:
        sample_lengths = z_vals                                       # broadcasts for free
    return sample_points, sample_lengths


def _reference(origins, directions, n_pts, min_depth, max_depth):
    z = jnp.linspace(min_depth, max_depth, n_pts)                     # (P,)
    z_vals = jnp.broadcast_to(z[:, None], (n_pts, 3))                 # (P, 3)
    dirs = directions[:, None, :] * z_vals[None, :, :]                # (N, P, 3)
    sample_points = origins[:, None, :] + dirs                        # (N, P, 3)
    sample_lengths = jnp.broadcast_to(z_vals[None], sample_points.shape)
    return sample_points, sample_lengths


if __name__ == "__main__":
    key = jax.random.PRNGKey(0)
    MIN_DEPTH, MAX_DEPTH = 2.0, 6.0

    cases = [
        # (n_rays, n_pts, ray_tile, pytorch_layout, materialize_lengths)
        (200, 8, None, True, True),    # padded ray tail; full PyTorch-shaped outputs
        (512, 8, 256, True, False),    # explicit tile override; compact (P,3) lengths
        (300, 20, None, False, False), # P not a multiple of 8; lane-dense fast path
    ]
    for idx, (n_rays, n_pts, tile, torch_layout, mat_len) in enumerate(cases):
        k_o, k_d = jax.random.split(jax.random.fold_in(key, idx))
        origins = jax.random.normal(k_o, (n_rays, 3), dtype=jnp.float32)
        directions = jax.random.normal(k_d, (n_rays, 3), dtype=jnp.float32)

        sp, sl = stratified_raysampler(
            origins, directions, n_pts_per_ray=n_pts,
            min_depth=MIN_DEPTH, max_depth=MAX_DEPTH, ray_tile=tile,
            pytorch_layout=torch_layout, materialize_lengths=mat_len)
        jax.block_until_ready((sp, sl))

        sp_ref, sl_ref = _reference(origins, directions, n_pts, MIN_DEPTH, MAX_DEPTH)
        if torch_layout:
            assert sp.shape == (n_rays, n_pts, 3)
            assert jnp.allclose(sp, sp_ref, atol=1e-5, rtol=1e-5)
            if mat_len:
                assert sl.shape == (n_rays, n_pts, 3)
                assert jnp.allclose(sl, sl_ref)
            else:
                assert sl.shape == (n_pts, 3)
                assert jnp.allclose(jnp.broadcast_to(sl[None], sl_ref.shape), sl_ref)
        else:
            assert sp.shape == (3, n_pts, n_rays)
            assert jnp.allclose(jnp.transpose(sp, (2, 1, 0)), sp_ref,
                                atol=1e-5, rtol=1e-5)
            assert sl.shape == (n_pts, 3)
            assert jnp.allclose(jnp.broadcast_to(sl[None], sl_ref.shape), sl_ref)

    print("KERNEL_OK")
</pallas_src>

<mosaic_0001>
module attributes {stable_mosaic.version = 11 : i64} {
  func.func @_raysampler_kernel(%arg0: i32, %arg1: memref<6x128xf32, #tpu.memory_space<vmem>>, %arg2: memref<8x1xf32, #tpu.memory_space<vmem>>, %arg3: memref<24x128xf32, #tpu.memory_space<vmem>>) attributes {dimension_semantics = [#tpu.dimension_semantics<parallel>], iteration_bounds = array<i64: 2>, scalar_prefetch = 0 : i64, scratch_operands = 0 : i64, tpu.core_type = #tpu.core_type<tc>, window_params = [{transform_indices = @transform_0, window_bounds = array<i64: 6, 128>}, {pipeline_mode = #tpu.pipeline_mode<synchronous>, transform_indices = @transform_1, window_bounds = array<i64: 8, 1>}, {transform_indices = @transform_2, window_bounds = array<i64: 24, 128>}]} {
    %c0 = arith.constant 0 : index
    %c0_0 = arith.constant 0 : index
    %0 = vector.load %arg2[%c0, %c0_0] : memref<8x1xf32, #tpu.memory_space<vmem>>, vector<8x1xf32>
    %c0_i32 = arith.constant 0 : i32
    %1 = tpu.assume_multiple %c0_i32, 128 : i32
    %c0_1 = arith.constant 0 : index
    %2 = arith.index_cast %1 : i32 to index
    %3 = vector.load %arg1[%c0_1, %2] : memref<6x128xf32, #tpu.memory_space<vmem>>, vector<1x128xf32>
    %c3 = arith.constant 3 : index
    %4 = arith.index_cast %1 : i32 to index
    %5 = vector.load %arg1[%c3, %4] : memref<6x128xf32, #tpu.memory_space<vmem>>, vector<1x128xf32>
    %6 = vector.broadcast %5 : vector<1x128xf32> to vector<8x128xf32>
    %7 = vector.broadcast %0 : vector<8x1xf32> to vector<8x128xf32>
    %8 = arith.mulf %6, %7 : vector<8x128xf32>
    %9 = vector.broadcast %3 : vector<1x128xf32> to vector<8x128xf32>
    %10 = arith.addf %9, %8 : vector<8x128xf32>
    %c0_2 = arith.constant 0 : index
    %11 = arith.index_cast %1 : i32 to index
    %12 = vector.load %arg3[%c0_2, %11] : memref<24x128xf32, #tpu.memory_space<vmem>>, vector<8x128xf32>
    tpu.vector_store %arg3[%c0_2, %11], %10 {strides = array<i32>} : memref<24x128xf32, #tpu.memory_space<vmem>>, vector<8x128xf32>,
    %c1 = arith.constant 1 : index
    %13 = arith.index_cast %1 : i32 to index
    %14 = vector.load %arg1[%c1, %13] : memref<6x128xf32, #tpu.memory_space<vmem>>, vector<1x128xf32>
    %c4 = arith.constant 4 : index
    %15 = arith.index_cast %1 : i32 to index
    %16 = vector.load %arg1[%c4, %15] : memref<6x128xf32, #tpu.memory_space<vmem>>, vector<1x128xf32>
    %17 = vector.broadcast %16 : vector<1x128xf32> to vector<8x128xf32>
    %18 = vector.broadcast %0 : vector<8x1xf32> to vector<8x128xf32>
    %19 = arith.mulf %17, %18 : vector<8x128xf32>
    %20 = vector.broadcast %14 : vector<1x128xf32> to vector<8x128xf32>
    %21 = arith.addf %20, %19 : vector<8x128xf32>
    %c8 = arith.constant 8 : index
    %22 = arith.index_cast %1 : i32 to index
    %23 = vector.load %arg3[%c8, %22] : memref<24x128xf32, #tpu.memory_space<vmem>>, vector<8x128xf32>
    tpu.vector_store %arg3[%c8, %22], %21 {strides = array<i32>} : memref<24x128xf32, #tpu.memory_space<vmem>>, vector<8x128xf32>,
    %c2 = arith.constant 2 : index
    %24 = arith.index_cast %1 : i32 to index
    %25 = vector.load %arg1[%c2, %24] : memref<6x128xf32, #tpu.memory_space<vmem>>, vector<1x128xf32>
    %c5 = arith.constant 5 : index
    %26 = arith.index_cast %1 : i32 to index
    %27 = vector.load %arg1[%c5, %26] : memref<6x128xf32, #tpu.memory_space<vmem>>, vector<1x128xf32>
    %28 = vector.broadcast %27 : vector<1x128xf32> to vector<8x128xf32>
    %29 = vector.broadcast %0 : vector<8x1xf32> to vector<8x128xf32>
    %30 = arith.mulf %28, %29 : vector<8x128xf32>
    %31 = vector.broadcast %25 : vector<1x128xf32> to vector<8x128xf32>
    %32 = arith.addf %31, %30 : vector<8x128xf32>
    %c16 = arith.constant 16 : index
    %33 = arith.index_cast %1 : i32 to index
    %34 = vector.load %arg3[%c16, %33] : memref<24x128xf32, #tpu.memory_space<vmem>>, vector<8x128xf32>
    tpu.vector_store %arg3[%c16, %33], %32 {strides = array<i32>} : memref<24x128xf32, #tpu.memory_space<vmem>>, vector<8x128xf32>,
    return
  }
  func.func @transform_0(%arg0: i32) -> (i32, i32) {
    %c0_i32 = arith.constant 0 : i32
    %c0_i32_0 = arith.constant 0 : i32
    return %c0_i32, %arg0 : i32, i32
  }
  func.func @transform_1(%arg0: i32) -> (i32, i32) {
    %c0_i32 = arith.constant 0 : i32
    %c0_i32_0 = arith.constant 0 : i32
    %c0_i32_1 = arith.constant 0 : i32
    return %c0_i32, %c0_i32_0 : i32, i32
  }
  func.func @transform_2(%arg0: i32) -> (i32, i32) {
    %c0_i32 = arith.constant 0 : i32
    %c0_i32_0 = arith.constant 0 : i32
    return %c0_i32, %arg0 : i32, i32
  }
}

</mosaic_0001>

<llo_original>
// kernel: tpu_custom_call.1
$region0: #{tpu_custom_call.1}
  #allocation0 [shape = 'u32[]', space=smem, size = 0x4, offset = 0x4, fixed_abs, tag = 'smem constant byte address 0x4 - core index']
  #allocation1 [shape = 'u32[144,128]{1,0:T(1,128)}', space=vmem, size = 0x12000, scoped, tag = 'internal scratch']
  %s0 = inlined_call_operand.hbm [shape: f32[6,256], index: 0, kind: input, shape index: {}]
  %s1 = inlined_call_operand.vmem [shape: f32[8,1], index: 1, kind: input, shape index: {}]
  %s2 = inlined_call_operand.hbm [shape: f32[24,256], index: 2, kind: output, shape index: {}]
  %s3 = sld [smem:[#allocation0]]
  $region45: #{tpu_custom_call.1} parent=0
    _
  %s5 = ssub.s32 1, %s3
  %s6 = scalar_select 0, %s5, %s3
  $region1: #{tpu_custom_call.1} parent=0
    #allocation2 [shape = 'u8[8192]{0}', space=vmem, size = 0x2000, scoped, tag = 'input window, operand 0']
    #allocation3 [shape = 's32[2]{0}', space=sflag, size = 0x8, scoped, tag = 'scoped memory for tpu_custom_call.1']
    #allocation4 [shape = 's32[2]{0}', space=sflag, size = 0x8, scoped, tag = 'scoped memory for tpu_custom_call.1']
    #allocation5 [shape = 'u8[24576]{0}', space=vmem, size = 0x6000, scoped, tag = 'output window, operand 0']
    %7 = vsyncpa [#allocation3], 0
    %s8 = scalar_lea.sflag [#allocation3], 1
    %9 = vsyncpa %s8, 0
    %10 = vsyncpa [#allocation4], 0
    %s11 = scalar_lea.sflag [#allocation4], 1
    %12 = vsyncpa %s11, 0
    loop: start=0, step=1, limit=4
    $region2: #{tpu_custom_call.1} parent=1 // loop_pre_header
      _
    $region3: #{tpu_custom_call.1} parent=1 // loop_header
      %s14 = sphi 0, %s18
      %p15 = scmp.ge.s32.totalorder %s14, 4
      %s24 = sphi 0, %s26
      %s27 = sphi 0, %s24
      %s28 = sphi 0, %s27
      %s44 = sphi 0, %s28
      %s48 = sphi 0, %s48
      %s50 = sphi 0, %s48
      %s51 = sphi 0, %s50
      %s65 = sphi 0, %s51
      %s71 = sphi 0, %s73
      %s74 = sphi 0, %s71
      %s75 = sphi 0, %s74
      %s91 = sphi 0, %s75
    $region4: #{tpu_custom_call.1} parent=1 // loop_header_branch
      %17 = sbr.rel (%p15) target = $region8
    $region5: #{tpu_custom_call.1} parent=1 // loop_body
      %s19 = ssub.s32 %s14, 1
      %s20 = ssub.s32 %s14, 2
      %s21 = sadd.s32 %s14, 1
      %s22 = ssub.s32 %s14, %s21
      %p23 = scmp.eq.s32.totalorder %s22, 0
      %s25 = sadd.s32 %s24, 1
      %s26 = scalar_select %p23, %s24, %s25
      %p29 = pneg %p23
      %p30 = scmp.eq.s32.totalorder %s14, 1
      %p31 = por %p29, %p30
      %p32 = scmp.ne.s32.totalorder %s24, %s27
      %p33 = scmp.eq.s32.totalorder %s14, 0
      %p34 = por %p32, %p33
      %p35 = scmp.ne.s32.totalorder %s24, %s27
      %p36 = scmp.eq.s32.totalorder %s19, 1
      %p37 = por %p35, %p36
      %p38 = scmp.ne.s32.totalorder %s27, %s28
      %p39 = scmp.eq.s32.totalorder %s19, 0
      %p40 = por %p38, %p39
      %p41 = scmp.ne.s32.totalorder %s27, %s28
      %p42 = scmp.eq.s32.totalorder %s20, 1
      %p43 = por %p41, %p42
      %p45 = scmp.ne.s32.totalorder %s28, %s44
      %p46 = scmp.eq.s32.totalorder %s20, 0
      %p47 = por %p45, %p46
      %s49 = sadd.s32 %s48, 1
      %p52 = scmp.eq.s32.totalorder %s14, 1
      %p53 = scmp.ne.s32.totalorder %s48, %s50
      %p54 = scmp.eq.s32.totalorder %s14, 0
      %p55 = por %p53, %p54
      %p56 = scmp.ne.s32.totalorder %s48, %s50
      %p57 = scmp.eq.s32.totalorder %s19, 1
      %p58 = por %p56, %p57
      %p59 = scmp.ne.s32.totalorder %s50, %s51
      %p60 = scmp.eq.s32.totalorder %s19, 0
      %p61 = por %p59, %p60
      %p62 = scmp.ne.s32.totalorder %s50, %s51
      %p63 = scmp.eq.s32.totalorder %s20, 1
      %p64 = por %p62, %p63
      %p66 = scmp.ne.s32.totalorder %s51, %s65
      %p67 = scmp.eq.s32.totalorder %s20, 0
      %p68 = por %p66, %p67
      %s69 = ssub.s32 %s14, %s21
      %p70 = scmp.eq.s32.totalorder %s69, 0
      %s72 = sadd.s32 %s71, 1
      %s73 = scalar_select %p70, %s71, %s72
      %p76 = pneg %p70
      %p77 = scmp.eq.s32.totalorder %s14, 1
      %p78 = por %p76, %p77
      %p79 = scmp.ne.s32.totalorder %s71, %s74
      %p80 = scmp.eq.s32.totalorder %s14, 0
      %p81 = por %p79, %p80
      %p82 = scmp.ne.s32.totalorder %s71, %s74
      %p83 = scmp.eq.s32.totalorder %s19, 1
      %p84 = por %p82, %p83
      %p85 = scmp.ne.s32.totalorder %s74, %s75
      %p86 = scmp.eq.s32.totalorder %s19, 0
      %p87 = por %p85, %p86
      %p88 = scmp.ne.s32.totalorder %s74, %s75
      %p89 = scmp.eq.s32.totalorder %s20, 1
      %p90 = por %p88, %p89
      %p92 = scmp.ne.s32.totalorder %s75, %s91
      %p93 = scmp.eq.s32.totalorder %s20, 0
      %p94 = por %p92, %p93
      %p95 = scmp.le.s32.totalorder 1, %s14
      %p96 = scmp.lt.s32.totalorder %s14, 3
      %p97 = pnand %p95, %p96
      %p98 = pneg %p97
      // Predicated region
      $region9: #{tpu_custom_call.1} parent=5 // pred_check
        _
      $region10: #{tpu_custom_call.1} parent=5 // pred_check_branch
        %100 = sbr.rel (%p97) target = $region12
      $region11: #{tpu_custom_call.1} parent=5 // pred_region
        %s101 = ssub.s32 %s14, 1
        // Predicated region
        $region13: #{tpu_custom_call.1} parent=11 // pred_check
          %p102 = pneg %p61
        $region14: #{tpu_custom_call.1} parent=11 // pred_check_branch
          %104 = sbr.rel (%p102) target = $region16
        $region15: #{tpu_custom_call.1} parent=11 // pred_region
          _
        $region16: #{tpu_custom_call.1} parent=11 // pred_fallthru
          _
      $region12: #{tpu_custom_call.1} parent=5 // pred_fallthru
        _
      %p105 = scmp.lt.s32.totalorder %s14, 2
      // Predicated region
      $region17: #{tpu_custom_call.1} parent=5 // pred_check
        %p106 = pneg %p105
      $region18: #{tpu_custom_call.1} parent=5 // pred_check_branch
        %108 = sbr.rel (%p106) target = $region20
      $region19: #{tpu_custom_call.1} parent=5 // pred_region
        // Predicated region
        $region21: #{tpu_custom_call.1} parent=19 // pred_check
          %p109 = pneg %p34
        $region22: #{tpu_custom_call.1} parent=19 // pred_check_branch
          %111 = sbr.rel (%p109) target = $region24
        $region23: #{tpu_custom_call.1} parent=19 // pred_region
          %s112 = sand.u32 %s24, 1
          %s113 = scalar_lea.sflag [#allocation3], %s112
          %s114 = sand.u32 %s24, 1
          %s115 = smul.addr %s114, 8
          %s116 = scalar_lea.vmem [#allocation2], %s115
          %s118 = ssub.s32 128, 128
          %119 = vsyncadd %s113, %s118
          %s120 = smul.addr %s14, 128
          %s121 = scalar_lea.hbm %s0, %s120
          %s123 = sshll.u32 %s116, 4
          %s124 = int_to_ptr.vmem [resolvable:$true] %s123
          %126 = dma.hbm_to_vmem [thread:$0]  %s121, 128, %s124, %s113
        $region24: #{tpu_custom_call.1} parent=19 // pred_fallthru
          _
      $region20: #{tpu_custom_call.1} parent=5 // pred_fallthru
        _
      %p127 = scmp.le.s32.totalorder 1, %s14
      %p128 = scmp.lt.s32.totalorder %s14, 3
      %p129 = pnand %p127, %p128
      %p130 = pneg %p129
      // Predicated region
      $region25: #{tpu_custom_call.1} parent=5 // pred_check
        _
      $region26: #{tpu_custom_call.1} parent=5 // pred_check_branch
        %132 = sbr.rel (%p129) target = $region28
      $region27: #{tpu_custom_call.1} parent=5 // pred_region
        %s133 = ssub.s32 %s14, 1
        %s134 = sand.u32 %s27, 1
        %s135 = scalar_lea.sflag [#allocation3], %s134
        %s136 = sand.u32 %s27, 1
        %s137 = smul.addr %s136, 8
        %s138 = scalar_lea.vmem [#allocation2], %s137
        // Predicated region
        $region29: #{tpu_custom_call.1} parent=27 // pred_check
          %p139 = pneg %p40
        $region30: #{tpu_custom_call.1} parent=27 // pred_check_branch
          %141 = sbr.rel (%p139) target = $region32
        $region31: #{tpu_custom_call.1} parent=27 // pred_region
          %142 = dma.done %s135, 128
        $region32: #{tpu_custom_call.1} parent=27 // pred_fallthru
          _
        %s143 = sand.u32 %s27, 1
        %s144 = scalar_lea.sflag [#allocation3], %s143
        %s145 = sand.u32 %s27, 1
        %s146 = smul.addr %s145, 8
        %s147 = scalar_lea.vmem [#allocation2], %s146
        %p148 = pneg %p40
        %p149 = pneg %p37
        %p150 = pneg %p61
        %p151 = pneg %p58
        %p152 = pneg %p87
        %p153 = pneg %p84
        %s154 = sand.u32 %s74, 1
        %s155 = scalar_lea.sflag [#allocation4], %s154
        %s156 = sand.u32 %s74, 1
        %s157 = smul.addr %s156, 24
        %s158 = scalar_lea.vmem [#allocation5], %s157
        %v159 = vld [vmem:[%s1] sm:$0xff]
        %v160 = vld [vmem:[%s138] sm:$0x1]
        %v161 = vld [vmem:[%s138 + $0x3] sm:$0x1]
        %v162 = vlaneseq
        %v163 = vshrl.u32 %v162, 7
        %v164 = vsub.s32 0, %v163
        %v165 = vrot.slane %v161, %v164
        %167 = vset.pattern.permute.xlu0 0
        %168 = vperm.xlu0 %167, %v159
        %v169 = vpop.permute.xlu0 %168
        %v171 = vmul.f32 %v165, %v169
        %v172 = vlaneseq
        %v173 = vshrl.u32 %v172, 7
        %v174 = vsub.s32 0, %v173
        %v175 = vrot.slane %v160, %v174
        %v176 = vadd.f32 %v175, %v171
        %177 = vst [vmem:[%s158] sm:$0xff] %v176
        %v178 = vld [vmem:[%s138 + $0x1] sm:$0x1]
        %v179 = vld [vmem:[%s138 + $0x4] sm:$0x1]
        %v180 = vlaneseq
        %v181 = vshrl.u32 %v180, 7
        %v182 = vsub.s32 0, %v181
        %v183 = vrot.slane %v179, %v182
        %v184 = vmul.f32 %v183, %v169
        %v185 = vlaneseq
        %v186 = vshrl.u32 %v185, 7
        %v187 = vsub.s32 0, %v186
        %v188 = vrot.slane %v178, %v187
        %v189 = vadd.f32 %v188, %v184
        %190 = vst [vmem:[%s158 + $0x8] sm:$0xff] %v189
        %v191 = vld [vmem:[%s138 + $0x2] sm:$0x1]
        %v192 = vld [vmem:[%s138 + $0x5] sm:$0x1]
        %v193 = vlaneseq
        %v194 = vshrl.u32 %v193, 7
        %v195 = vsub.s32 0, %v194
        %v196 = vrot.slane %v192, %v195
        %v197 = vmul.f32 %v196, %v169
        %v198 = vlaneseq
        %v199 = vshrl.u32 %v198, 7
        %v200 = vsub.s32 0, %v199
        %v201 = vrot.slane %v191, %v200
        %v202 = vadd.f32 %v201, %v197
        %203 = vst [vmem:[%s158 + $0x10] sm:$0xff] %v202
        %s204 = sand.u32 %s74, 1
        %s205 = scalar_lea.sflag [#allocation4], %s204
        %s206 = sand.u32 %s74, 1
        %s207 = smul.addr %s206, 24
        %s208 = scalar_lea.vmem [#allocation5], %s207
        // Predicated region
        $region33: #{tpu_custom_call.1} parent=27 // pred_check
          %p209 = pneg %p84
        $region34: #{tpu_custom_call.1} parent=27 // pred_check_branch
          %211 = sbr.rel (%p209) target = $region36
        $region35: #{tpu_custom_call.1} parent=27 // pred_region
          %s213 = ssub.s32 384, 384
          %214 = vsyncadd %s205, %s213
          %s215 = smul.addr %s19, 128
          %s216 = scalar_lea.hbm %s2, %s215
          %s217 = sshll.u32 %s208, 4
          %s218 = int_to_ptr.vmem [resolvable:$true] %s217
          %223 = dma.vmem_to_hbm [thread:$0]  %s218, 384, %s216, %s205, 128, 256, 8
        $region36: #{tpu_custom_call.1} parent=27 // pred_fallthru
          _
      $region28: #{tpu_custom_call.1} parent=5 // pred_fallthru
        _
      %p224 = scmp.le.s32.totalorder 2, %s14
      // Predicated region
      $region37: #{tpu_custom_call.1} parent=5 // pred_check
        %p225 = pneg %p224
      $region38: #{tpu_custom_call.1} parent=5 // pred_check_branch
        %227 = sbr.rel (%p225) target = $region40
      $region39: #{tpu_custom_call.1} parent=5 // pred_region
        %s228 = ssub.s32 %s14, 2
        // Predicated region
        $region41: #{tpu_custom_call.1} parent=39 // pred_check
          %p229 = pneg %p90
        $region42: #{tpu_custom_call.1} parent=39 // pred_check_branch
          %231 = sbr.rel (%p229) target = $region44
        $region43: #{tpu_custom_call.1} parent=39 // pred_region
          %s232 = sand.u32 %s75, 1
          %s233 = scalar_lea.sflag [#allocation4], %s232
          %s234 = sand.u32 %s75, 1
          %s235 = smul.addr %s234, 24
          %s236 = scalar_lea.vmem [#allocation5], %s235
          %237 = dma.done %s233, 384
        $region44: #{tpu_custom_call.1} parent=39 // pred_fallthru
          _
      $region40: #{tpu_custom_call.1} parent=5 // pred_fallthru
        _
    $region6: #{tpu_custom_call.1} parent=1 // loop_footer
      %s18 = sadd.s32 1, %s14
    $region7: #{tpu_custom_call.1} parent=1 // loop_footer_branch
      %13 = sbr.rel target = $region3
    $region8: #{tpu_custom_call.1} parent=1 // loop_exit
      _
    %238 = vsyncpa [#allocation3], 1
    %s239 = scalar_lea.sflag [#allocation3], 1
    %240 = vsyncpa %s239, 1
    %241 = vsyncpa [#allocation4], 1
    %s242 = scalar_lea.sflag [#allocation4], 1
    %243 = vsyncpa %s242, 1

</llo_original>
